<compile_context>
chip_gen: v5e
topology: v5e:2x2
jax: 0.10.0
libtpu: 0.0.40
codegen_flags: <defaults>
</compile_context>

<pallas_src>
import jax
import jax.numpy as jnp
from jax.experimental import pallas as pl
from jax.experimental.pallas import tpu as pltpu


# ---------------------------------------------------------------------------
# Kernels
# ---------------------------------------------------------------------------
def _softmax_accumulate_kernel(w_ref, x_ref, o_ref):
    # w_ref: (1, B) f32, x_ref: (B, TD) native dtype, o_ref: (1, TD) f32
    w = w_ref[...].astype(jnp.float32)
    m = jnp.max(w, axis=-1, keepdims=True)
    e = jnp.exp(w - m)
    p = e / jnp.sum(e, axis=-1, keepdims=True)          # softmax over dim=1
    acc = jnp.dot(p.astype(x_ref.dtype), x_ref[...],
                  preferred_element_type=jnp.float32)
    o_ref[...] = acc.astype(o_ref.dtype)


def _linear_rowvec_kernel(w_ref, b_ref, xt_ref, o_ref):
    # w_ref: (1, B) f32, b_ref: (1,) f32 in SMEM, xt_ref: (B, TN), o_ref: (1, TN)
    acc = jnp.dot(w_ref[...].astype(xt_ref.dtype), xt_ref[...],
                  preferred_element_type=jnp.float32)
    o_ref[...] = (acc + b_ref[0]).astype(o_ref.dtype)


# ---------------------------------------------------------------------------
# Tiling helpers
# ---------------------------------------------------------------------------
def _pick_tile(dim, rows, itemsize):
    """Tile width along the lane (last) dim for a (rows, dim) operand.

    Full extent when small (always a legal block shape); otherwise a multiple
    of 128 sized to ~4 MiB per tile (~8 MiB double-buffered), which fits the
    default scoped VMEM on every generation incl. v7x's 64 MiB part.
    """
    if dim <= 1024:
        return dim
    target_bytes = 4 << 20
    td = max(512, target_bytes // max(1, rows * itemsize))
    td = (td // 128) * 128
    return dim if td >= dim else td


_COMPILER_PARAMS = pltpu.CompilerParams(
    dimension_semantics=("parallel",),
    vmem_limit_bytes=48 * 1024 * 1024,
)


# ---------------------------------------------------------------------------
# Wrapper
# ---------------------------------------------------------------------------
def convex_accumulator_forward(x, weight, bias, normalization="softmax",
                               x_transposed=False):
    """Mirror of ConvexAccumulator.forward (inference path).

    softmax branch:   x (B, D)            -> (1, D)
    relu/threshold:   x (N, B)            -> (N, 1)
                      (or pass x already as (B, N) with x_transposed=True to
                       skip the wrapper-side transpose)
    """
    weight = weight.astype(jnp.float32)
    bias = jnp.asarray(bias, jnp.float32).reshape(1)

    if normalization == "softmax":
        B, D = x.shape
        assert weight.shape == (1, B)
        td = _pick_tile(D, B, x.dtype.itemsize)
        cost = pl.CostEstimate(
            flops=2 * B * D,
            transcendentals=B,
            bytes_accessed=B * D * x.dtype.itemsize + 4 * B + 4 * D,
        )
        return pl.pallas_call(
            _softmax_accumulate_kernel,
            out_shape=jax.ShapeDtypeStruct((1, D), jnp.float32),
            grid=(pl.cdiv(D, td),),
            in_specs=[
                pl.BlockSpec((1, B), lambda i: (0, 0)),   # weight, resident
                pl.BlockSpec((B, td), lambda i: (0, i)),  # x, tiled over D
            ],
            out_specs=pl.BlockSpec((1, td), lambda i: (0, i)),
            compiler_params=_COMPILER_PARAMS,
            cost_estimate=cost,
        )(weight, x)

    # 'threshold' / 'relu' branch: Linear(B, 1) application, computed as
    # out^T = w @ x^T for lane-dense DMAs/stores.  The stateful weight
    # re-normalization of normalize_weights() is applied outside (helpers
    # below), matching the no-grad parameter update in the PyTorch module.
    if x_transposed:
        B, N = x.shape
        xt = x
    else:
        N, B = x.shape
        xt = x.T  # single XLA transpose; callers with (B, N) layout can skip it
    assert weight.shape == (1, B)
    tn = _pick_tile(N, B, x.dtype.itemsize)
    cost = pl.CostEstimate(
        flops=2 * B * N,
        transcendentals=0,
        bytes_accessed=B * N * x.dtype.itemsize + 4 * B + 4 * N + 4,
    )
    out_t = pl.pallas_call(
        _linear_rowvec_kernel,
        out_shape=jax.ShapeDtypeStruct((1, N), jnp.float32),
        grid=(pl.cdiv(N, tn),),
        in_specs=[
            pl.BlockSpec((1, B), lambda i: (0, 0)),                    # weight
            pl.BlockSpec(memory_space=pltpu.MemorySpace.SMEM),         # bias
            pl.BlockSpec((B, tn), lambda i: (0, i)),                   # x^T
        ],
        out_specs=pl.BlockSpec((1, tn), lambda i: (0, i)),
        compiler_params=_COMPILER_PARAMS,
        cost_estimate=cost,
    )(weight, bias, xt)
    return out_t.reshape(N, 1)


# ---------------------------------------------------------------------------
# Stateful normalize_weights() equivalents (plain JAX; no-grad param updates)
# ---------------------------------------------------------------------------
def relu_normalize_weights(weight):
    tmp = jax.nn.relu(weight)
    return tmp / jnp.sum(tmp)


def threshold_normalize_weights(weight):
    tmp = weight - jnp.min(weight)
    return tmp / jnp.sum(tmp)


# TODO(synk): the training-time counter / update_frequency bookkeeping of the
# PyTorch module is host-side Python state, not part of the forward kernel.


# ---------------------------------------------------------------------------
# Demo / self-check
# ---------------------------------------------------------------------------
if __name__ == "__main__":
    key = jax.random.PRNGKey(0)
    kw, kb, kx, kx2 = jax.random.split(key, 4)

    batch_size = 8     # ConvexAccumulator(batch_size=8)
    hidden = 32        # feature dim of the accumulated tensor
    n_rows = 16        # rows for the Linear(B, 1) branch

    # Deterministic nn.Linear-style init: U(-1/sqrt(B), 1/sqrt(B))
    bound = 1.0 / jnp.sqrt(jnp.float32(batch_size))
    weight = jax.random.uniform(kw, (1, batch_size), jnp.float32, -bound, bound)
    bias = jax.random.uniform(kb, (1,), jnp.float32, -bound, bound)

    # --- softmax branch (default normalization): x is (batch_size, hidden) ---
    x = jax.random.normal(kx, (batch_size, hidden), jnp.float32)
    out = convex_accumulator_forward(x, weight, bias, normalization="softmax")
    out = jax.block_until_ready(out)
    ref = jax.nn.softmax(weight, axis=1) @ x
    assert out.shape == (1, hidden)
    assert jnp.allclose(out, ref, atol=1e-5, rtol=1e-5)

    # --- relu branch (layer(x) path): x is (n_rows, batch_size) ---
    x_lin = jax.random.normal(kx2, (n_rows, batch_size), jnp.float32)
    w_relu = relu_normalize_weights(weight)
    out2 = convex_accumulator_forward(x_lin, w_relu, bias, normalization="relu")
    out2 = jax.block_until_ready(out2)
    ref2 = x_lin @ w_relu.T + bias.reshape(1, 1)
    assert out2.shape == (n_rows, 1)
    assert jnp.allclose(out2, ref2, atol=1e-5, rtol=1e-5)

    # --- threshold branch shares the same kernel ---
    w_thr = threshold_normalize_weights(weight)
    out3 = convex_accumulator_forward(x_lin, w_thr, bias,
                                      normalization="threshold")
    out3 = jax.block_until_ready(out3)
    ref3 = x_lin @ w_thr.T + bias.reshape(1, 1)
    assert jnp.allclose(out3, ref3, atol=1e-5, rtol=1e-5)

    print("KERNEL_OK")
</pallas_src>

<mosaic_0001>
module attributes {stable_mosaic.version = 11 : i64} {
  func.func @_softmax_accumulate_kernel(%arg0: i32, %arg1: memref<1x8xf32, #tpu.memory_space<vmem>>, %arg2: memref<8x32xf32, #tpu.memory_space<vmem>>, %arg3: memref<1x32xf32, #tpu.memory_space<vmem>>) attributes {dimension_semantics = [#tpu.dimension_semantics<parallel>], iteration_bounds = array<i64: 1>, scalar_prefetch = 0 : i64, scratch_operands = 0 : i64, tpu.core_type = #tpu.core_type<tc>, window_params = [{pipeline_mode = #tpu.pipeline_mode<synchronous>, transform_indices = @transform_0, window_bounds = array<i64: 1, 8>}, {transform_indices = @transform_1, window_bounds = array<i64: 8, 32>}, {transform_indices = @transform_2, window_bounds = array<i64: 1, 32>}]} {
    %c0 = arith.constant 0 : index
    %c0_0 = arith.constant 0 : index
    %0 = vector.load %arg1[%c0, %c0_0] : memref<1x8xf32, #tpu.memory_space<vmem>>, vector<1x8xf32>
    %cst = arith.constant dense<0xFF800000> : vector<1xf32>
    %1 = vector.multi_reduction <maximumf>, %0, %cst [1] : vector<1x8xf32> to vector<1xf32>
    %2 = vector.shape_cast %1 : vector<1xf32> to vector<1x1xf32>
    %3 = vector.broadcast %2 : vector<1x1xf32> to vector<1x8xf32>
    %4 = arith.subf %0, %3 : vector<1x8xf32>
    %5 = math.exp %4 : vector<1x8xf32>
    %cst_1 = arith.constant dense<0.000000e+00> : vector<1xf32>
    %6 = vector.multi_reduction <add>, %5, %cst_1 [1] : vector<1x8xf32> to vector<1xf32>
    %7 = vector.shape_cast %6 : vector<1xf32> to vector<1x1xf32>
    %8 = vector.broadcast %7 : vector<1x1xf32> to vector<1x8xf32>
    %9 = arith.divf %5, %8 : vector<1x8xf32>
    %c0_2 = arith.constant 0 : index
    %c0_3 = arith.constant 0 : index
    %10 = vector.load %arg2[%c0_2, %c0_3] : memref<8x32xf32, #tpu.memory_space<vmem>>, vector<8x32xf32>
    %cst_4 = arith.constant dense<0.000000e+00> : vector<1x32xf32>
    %11 = tpu.matmul %9, %10, %cst_4 {dimension_numbers = #tpu.dot_dimension_numbers<[1], [0], [0], [1], [0, 0, 1, 1], [], []>} : vector<1x8xf32>, vector<8x32xf32>, vector<1x32xf32> -> vector<1x32xf32>
    %c0_5 = arith.constant 0 : index
    %c0_6 = arith.constant 0 : index
    %12 = vector.load %arg3[%c0_5, %c0_6] : memref<1x32xf32, #tpu.memory_space<vmem>>, vector<1x32xf32>
    tpu.vector_store %arg3[%c0_5, %c0_6], %11 {strides = array<i32>} : memref<1x32xf32, #tpu.memory_space<vmem>>, vector<1x32xf32>,
    return
  }
  func.func @transform_0(%arg0: i32) -> (i32, i32) {
    %c0_i32 = arith.constant 0 : i32
    %c0_i32_0 = arith.constant 0 : i32
    %c0_i32_1 = arith.constant 0 : i32
    return %c0_i32, %c0_i32_0 : i32, i32
  }
  func.func @transform_1(%arg0: i32) -> (i32, i32) {
    %c0_i32 = arith.constant 0 : i32
    %c0_i32_0 = arith.constant 0 : i32
    return %c0_i32, %arg0 : i32, i32
  }
  func.func @transform_2(%arg0: i32) -> (i32, i32) {
    %c0_i32 = arith.constant 0 : i32
    %c0_i32_0 = arith.constant 0 : i32
    return %c0_i32, %arg0 : i32, i32
  }
}

</mosaic_0001>

<llo_original>
// kernel: tpu_custom_call.1
$region0: #{tpu_custom_call.1}
  #allocation0 [shape = 'u32[]', space=smem, size = 0x4, offset = 0x4, fixed_abs, tag = 'smem constant byte address 0x4 - core index']
  #allocation1 [shape = 'u32[72,128]{1,0:T(1,128)}', space=vmem, size = 0x9000, scoped, tag = 'internal scratch']
  %s0 = inlined_call_operand.hbm [shape: f32[1,8], index: 0, kind: input, shape index: {}]
  %s1 = inlined_call_operand.hbm [shape: f32[8,32], index: 1, kind: input, shape index: {}]
  %s2 = inlined_call_operand.hbm [shape: f32[1,32], index: 2, kind: output, shape index: {}]
  %s3 = sld [smem:[#allocation0]]
  $region26: #{tpu_custom_call.1} parent=0
    _
  %s5 = ssub.s32 1, %s3
  %s6 = scalar_select 0, %s5, %s3
  $region1: #{tpu_custom_call.1} parent=0
    #allocation2 [shape = 'u8[512]{0}', space=vmem, size = 0x400, scoped, tag = 'input window, operand 0, single buffered']
    #allocation3 [shape = 's32[1]{0}', space=sflag, size = 0x4, scoped, tag = 'scoped memory for tpu_custom_call.1']
    #allocation4 [shape = 's32[1]{0}', space=sflag, size = 0x4, scoped, tag = 'scoped memory for tpu_custom_call.1']
    #allocation5 [shape = 'u8[4096]{0}', space=vmem, size = 0x1000, scoped, tag = 'input window, operand 1, single buffered']
    #allocation6 [shape = 's32[1]{0}', space=sflag, size = 0x4, scoped, tag = 'scoped memory for tpu_custom_call.1']
    #allocation7 [shape = 'u8[512]{0}', space=vmem, size = 0x400, scoped, tag = 'output window, operand 0, single buffered']
    %7 = vsyncpa [#allocation3], 0
    %8 = vsyncpa [#allocation6], 0
    %9 = vsyncpa [#allocation4], 0
    // Predicated region
    $region2: #{tpu_custom_call.1} parent=1 // pred_check
      _
    $region3: #{tpu_custom_call.1} parent=1 // pred_check_branch
      %11 = sbr.rel (0) target = $region5
    $region4: #{tpu_custom_call.1} parent=1 // pred_region
      %13 = vsyncadd [#allocation3], 0
      %s15 = sshll.u32 %s0, 4
      %s16 = int_to_ptr.hbm [resolvable:$true] %s15
      %s17 = sshll.u32 [#allocation2], 4
      %s18 = int_to_ptr.vmem [resolvable:$true] %s17
      %20 = dma.hbm_to_vmem [thread:$0]  %s16, 16, %s18, [#allocation3]
    $region5: #{tpu_custom_call.1} parent=1 // pred_fallthru
      _
    // Predicated region
    $region6: #{tpu_custom_call.1} parent=1 // pred_check
      _
    $region7: #{tpu_custom_call.1} parent=1 // pred_check_branch
      %22 = sbr.rel (0) target = $region9
    $region8: #{tpu_custom_call.1} parent=1 // pred_region
      %24 = vsyncadd [#allocation6], 0
      %s26 = sshll.u32 %s1, 4
      %s27 = int_to_ptr.hbm [resolvable:$true] %s26
      %s28 = sshll.u32 [#allocation5], 4
      %s29 = int_to_ptr.vmem [resolvable:$true] %s28
      %31 = dma.hbm_to_vmem [thread:$0]  %s27, 128, %s29, [#allocation6]
    $region9: #{tpu_custom_call.1} parent=1 // pred_fallthru
      _
    // Predicated region
    $region10: #{tpu_custom_call.1} parent=1 // pred_check
      _
    $region11: #{tpu_custom_call.1} parent=1 // pred_check_branch
      %33 = sbr.rel (0) target = $region13
    $region12: #{tpu_custom_call.1} parent=1 // pred_region
      %35 = dma.done [#allocation3], 16
    $region13: #{tpu_custom_call.1} parent=1 // pred_fallthru
      _
    // Predicated region
    $region14: #{tpu_custom_call.1} parent=1 // pred_check
      _
    $region15: #{tpu_custom_call.1} parent=1 // pred_check_branch
      %37 = sbr.rel (0) target = $region17
    $region16: #{tpu_custom_call.1} parent=1 // pred_region
      %39 = dma.done [#allocation6], 128
    $region17: #{tpu_custom_call.1} parent=1 // pred_fallthru
      _
    %v40 = vld [vmem:[#allocation2] sm:$0x1]
    %vm41 = vcmask 57344
    %v42 = vsel %vm41, %v40, -inf
    %43 = vmax.xlane.f32.xlu0 %v42
    %v44 = vpop.xlane.xlu0 %43
    %v45 = vsub.f32 %v40, %v44
    %v46 = vmul.f32 %v45, 1.442695
    %v47 = vpow.pop %v46
    %v48 = vsel %vm41, %v47, 0.0
    %49 = vadd.xlane.f32.xlu0 %v48
    %v50 = vpop.xlane.xlu0 %49
    %v51 = vrcp.pop %v50
    %v52 = vmul.f32 %v50, %v51
    %v53 = vsub.f32 1.0, %v52
    %v54 = vmul.f32 %v51, %v53
    %v55 = vadd.f32 %v51, %v54
    %vm56 = vweird.f32 %v50
    %vm57 = vweird.f32 %v51
    %vm58 = vmor %vm56, %vm57
    %v59 = vsel %vm58, %v51, %v55
    %v60 = vand.u32 2147483647, %v50
    %vm61 = vcmp.eq.f32.partialorder %v60, 8.507059e+37
    %v62 = vand.u32 %v50, 2147483648
    %v63 = vor.u32 1.1754944e-38, %v62
    %v64 = vsel %vm61, %v63, %v59
    %v65 = vmul.f32 %v47, %v64
    %v66 = vld [vmem:[#allocation5] sm:$0xff]
    %vm67 = vcmask 64512
    %v69 = vsel %vm67, %v65, 0
    %71 = vmatpush.msra.mxu0 0.0
    %72 = vmatpush.msra.mxu0 0.0
    %73 = vmatpush.msra.mxu0 0.0
    %74 = vmatpush.msra.mxu0 0.0
    %75 = vmatpush.msra.mxu0 0.0
    %76 = vmatpush.msra.mxu0 0.0
    %77 = vmatpush.msra.mxu0 0.0
    %78 = vmatpush.msra.mxu0 0.0
    %79 = vmatpush.msra.mxu0 0.0
    %80 = vmatpush.msra.mxu0 0.0
    %81 = vmatpush.msra.mxu0 0.0
    %82 = vmatpush.msra.mxu0 0.0
    %83 = vmatpush.msra.mxu0 0.0
    %84 = vmatpush.msra.mxu0 0.0
    %85 = vmatpush.msra.mxu0 0.0
    %86 = vmatpush.msra.mxu0 %v66
    %87 = vmatmul.f32.gmra.mxu0 %v69
    %v88 = vpop.f32.mrf.mxu0
    %v89 = vadd.f32 0.0, %v88
    %90 = vdwg.mxu0
    %vm91 = vcmask 253952
    %92 = vst.msk [vmem:[#allocation7] sm:$0x1] %vm91, %v89
    // Predicated region
    $region18: #{tpu_custom_call.1} parent=1 // pred_check
      _
    $region19: #{tpu_custom_call.1} parent=1 // pred_check_branch
      %94 = sbr.rel (0) target = $region21
    $region20: #{tpu_custom_call.1} parent=1 // pred_region
      %96 = vsyncadd [#allocation4], 0
      %s98 = sshll.u32 [#allocation7], 4
      %s99 = int_to_ptr.vmem [resolvable:$true] %s98
      %s100 = sshll.u32 %s2, 4
      %s101 = int_to_ptr.hbm [resolvable:$true] %s100
      %103 = dma.vmem_to_hbm [thread:$0]  %s99, 16, %s101, [#allocation4]
    $region21: #{tpu_custom_call.1} parent=1 // pred_fallthru
      _
    // Predicated region
    $region22: #{tpu_custom_call.1} parent=1 // pred_check
      _
    $region23: #{tpu_custom_call.1} parent=1 // pred_check_branch
      %105 = sbr.rel (0) target = $region25
    $region24: #{tpu_custom_call.1} parent=1 // pred_region
      %107 = dma.done [#allocation4], 16
    $region25: #{tpu_custom_call.1} parent=1 // pred_fallthru
      _
    %108 = vsyncpa [#allocation3], 1
    %109 = vsyncpa [#allocation6], 1
    %110 = vsyncpa [#allocation4], 1

</llo_original>
